<compile_context>
chip_gen: v5e
topology: v5e:2x2
jax: 0.10.0
libtpu: 0.0.40
codegen_flags: <defaults>
</compile_context>

<pallas_src>
import math

import jax
import jax.numpy as jnp
from jax import lax
from jax.experimental import pallas as pl
from jax.experimental.pallas import tpu as pltpu

_UNROLL = 8  # taps per inner unrolled block of the fori_loop


# ----------------------------- Pallas kernel --------------------------------
def _long_conv_kernel(k_ref, xlo_ref, xhi_ref, o_ref, acc_ref, xcat_ref):
    # k_ref   : (T, TD)      filter tap tile sj                        (f32)
    # xlo_ref : (1, T, TD)   x time-block (qi - sj - 1), clamped to 0
    # xhi_ref : (1, T, TD)   x time-block (qi - sj),     clamped to 0
    # o_ref   : (1, T, TD)   output block (b, qi, di)
    # acc_ref : (T, TD) f32  accumulator, persists across the tap axis
    # xcat_ref: (2T, TD) f32 scratch holding [x_lo ; x_hi] for shifted windows
    qi = pl.program_id(2)          # query-time tile
    sj = pl.program_id(3)          # tap tile (reduction axis)
    n_sj = pl.num_programs(3)
    delta = qi - sj
    T = o_ref.shape[1]

    @pl.when(sj == 0)
    def _init():
        # residual: at sj == 0 the "hi" block is exactly x[b, qi*T:(qi+1)*T, :]
        acc_ref[...] = xhi_ref[0].astype(jnp.float32)

    @pl.when(delta >= 0)           # taps with sj > qi cannot contribute (causal)
    def _accumulate():
        x_hi = xhi_ref[0].astype(jnp.float32)
        x_lo = xlo_ref[0].astype(jnp.float32)
        # in-tile causal boundary: on the diagonal tile the left window is zero
        x_lo = jnp.where(delta > 0, x_lo, 0.0)
        xcat_ref[pl.ds(0, T), :] = x_lo
        xcat_ref[pl.ds(T, T), :] = x_hi

        # Blocked tap loop: y[q0+i] += k[s0+j] * x[q0+i - (s0+j)]
        #   source index relative to xcat start = T + i - j, i.e. a contiguous
        #   sublane window xcat[T-j : 2T-j] for each tap offset j.
        def tap_block(jb, acc):
            j0 = pl.multiple_of(jb * _UNROLL, _UNROLL)
            for jj in range(_UNROLL):
                j = j0 + jj
                k_row = k_ref[pl.ds(j, 1), :]          # (1, TD) — sublane bcast
                src = xcat_ref[pl.ds(T - j, T), :]     # (T, TD) shifted window
                acc = acc + k_row * src
            return acc

        acc = acc_ref[...]
        n_full = T // _UNROLL
        if n_full > 0:
            acc = lax.fori_loop(0, n_full, tap_block, acc)
        for j in range(n_full * _UNROLL, T):           # static remainder taps
            acc = acc + k_ref[pl.ds(j, 1), :] * xcat_ref[pl.ds(T - j, T), :]
        acc_ref[...] = acc

    @pl.when(sj == n_sj - 1)
    def _finalize():
        o_ref[0] = acc_ref[...].astype(o_ref.dtype)


# ----------------------------- host-side glue --------------------------------
def positional_embedding(d_emb: int, seq_len: int) -> jnp.ndarray:
    """Matches PositionalEmbedding.__init__ (returns (L, d_emb), float32)."""
    bands = (d_emb - 1) // 2
    t = jnp.linspace(0.0, 1.0, seq_len)[:, None]                     # (L, 1)
    t_rescaled = jnp.linspace(0.0, seq_len - 1, seq_len)[:, None]    # (L, 1)
    w = 2.0 * jnp.pi * t_rescaled / seq_len                          # (L, 1)
    f = jnp.linspace(1e-4, bands - 1, bands)[None, :]                # (1, bands)
    zc = jnp.exp(-1j * f * w)                                        # (L, bands)
    return jnp.concatenate([t, zc.real, zc.imag], axis=-1).astype(jnp.float32)


def _filter_mlp(z, w1, b1, w2, b2):
    """Implicit filter k = MLP(pos_emb(L)): (L, D). Computed ONCE, in plain JAX
    (tiny matmuls; keeping them off the grid's critical loop per perf review)."""
    h = jnp.maximum(z @ w1.T + b1, 0.0)
    return (h @ w2.T + b2).astype(jnp.float32)


def implicit_long_convolution(x, z, w1, b1, w2, b2, *, time_tile=None, chan_tile=None):
    """x: (B, L, D).  Returns (B, L, D) — same semantics as the PyTorch module."""
    B, L, D = x.shape
    k = _filter_mlp(z, w1, b1, w2, b2)                 # (L, D)

    # Tile selection: last two block dims must be (8,128)-aligned or full-extent.
    if time_tile is None:
        time_tile = next((t for t in (512, 256, 128, 64, 32, 16, 8) if L % t == 0), L)
    if chan_tile is None:
        chan_tile = next((t for t in (512, 256, 128) if D % t == 0), D)
    T, TD = time_tile, chan_tile
    assert L % T == 0 and D % TD == 0, "tile must divide the array extent"
    n_dt, n_qt = D // TD, L // T

    grid = (B, n_dt, n_qt, n_qt)   # (batch, channel tile, query-time tile, tap tile)

    def k_map(b, di, qi, sj):
        return (sj, di)

    def xlo_map(b, di, qi, sj):    # time block (qi - sj - 1); clamped (masked in-kernel)
        return (b, jnp.maximum(qi - sj - 1, 0), di)

    def xhi_map(b, di, qi, sj):    # time block (qi - sj); clamped (skipped when sj > qi)
        return (b, jnp.maximum(qi - sj, 0), di)

    def out_map(b, di, qi, sj):
        return (b, qi, di)

    return pl.pallas_call(
        _long_conv_kernel,
        out_shape=jax.ShapeDtypeStruct((B, L, D), x.dtype),
        grid_spec=pltpu.PrefetchScalarGridSpec(
            num_scalar_prefetch=0,
            grid=grid,
            in_specs=[
                pl.BlockSpec((T, TD), k_map),          # filter tap tile
                pl.BlockSpec((1, T, TD), xlo_map),     # x "left" source block
                pl.BlockSpec((1, T, TD), xhi_map),     # x "right" source block
            ],
            out_specs=pl.BlockSpec((1, T, TD), out_map),
            scratch_shapes=[
                pltpu.VMEM((T, TD), jnp.float32),      # f32 accumulator
                pltpu.VMEM((2 * T, TD), jnp.float32),  # [x_lo ; x_hi] window
            ],
        ),
        compiler_params=pltpu.CompilerParams(
            dimension_semantics=("parallel", "parallel", "parallel", "arbitrary"),
            vmem_limit_bytes=48 * 1024 * 1024,         # headroom on v5e/v6e/v7x
        ),
    )(k, x, x)


# ----------------------------- pure-JAX reference ----------------------------
def reference(x, z, w1, b1, w2, b2):
    """Mirrors the PyTorch fft_conv path exactly (FFT-based)."""
    k = jnp.maximum(z @ w1.T + b1, 0.0) @ w2.T + b2      # (L, D)
    k = k.T[None]                                        # (1, D, L)
    u = jnp.transpose(x, (0, 2, 1))                      # (B, D, L)
    L = u.shape[-1]
    n = 2 * L
    k_f = jnp.fft.rfft(k, n=n) / n
    u_f = jnp.fft.rfft(u, n=n)
    y = jnp.fft.irfft(u_f * k_f, n=n, norm="forward")[..., :L]
    out = y + u
    return jnp.transpose(out, (0, 2, 1)).astype(x.dtype)


if __name__ == "__main__":
    B, L, D = 2, 64, 128          # batch, seq (= l_max), hidden_size
    d_emb, d_hidden = 3, 16

    key = jax.random.PRNGKey(0)
    k1, k2, k3, k4, kx = jax.random.split(key, 5)
    bound1 = 1.0 / math.sqrt(d_emb)
    bound2 = 1.0 / math.sqrt(d_hidden)
    w1 = jax.random.uniform(k1, (d_hidden, d_emb), jnp.float32, -bound1, bound1)
    b1 = jax.random.uniform(k2, (d_hidden,), jnp.float32, -bound1, bound1)
    w2 = jax.random.uniform(k3, (D, d_hidden), jnp.float32, -bound2, bound2)
    b2 = jax.random.uniform(k4, (D,), jnp.float32, -bound2, bound2)
    x = jax.random.normal(kx, (B, L, D), jnp.float32)

    z = positional_embedding(d_emb, L)   # frozen buffer (requires_grad=False)

    # small time tile so the demo exercises the multi-tile triangular path
    y = implicit_long_convolution(x, z, w1, b1, w2, b2, time_tile=16, chan_tile=128)
    y = jax.block_until_ready(y)

    y_ref = reference(x, z, w1, b1, w2, b2)
    max_err = float(jnp.max(jnp.abs(y - y_ref)))
    assert jnp.allclose(y, y_ref, atol=2e-3, rtol=2e-3), f"max abs err {max_err}"
    print("KERNEL_OK")
</pallas_src>

<mosaic_0001>
module attributes {stable_mosaic.version = 11 : i64} {
  func.func @_long_conv_kernel(%arg0: i32, %arg1: i32, %arg2: i32, %arg3: i32, %arg4: memref<16x128xf32, #tpu.memory_space<vmem>>, %arg5: memref<1x16x128xf32, #tpu.memory_space<vmem>>, %arg6: memref<1x16x128xf32, #tpu.memory_space<vmem>>, %arg7: memref<1x16x128xf32, #tpu.memory_space<vmem>>, %arg8: memref<16x128xf32, #tpu.memory_space<vmem>>, %arg9: memref<32x128xf32, #tpu.memory_space<vmem>>) attributes {dimension_semantics = [#tpu.dimension_semantics<parallel>, #tpu.dimension_semantics<parallel>, #tpu.dimension_semantics<parallel>, #tpu.dimension_semantics<arbitrary>], iteration_bounds = array<i64: 2, 1, 4, 4>, scalar_prefetch = 0 : i64, scratch_operands = 2 : i64, tpu.core_type = #tpu.core_type<tc>, window_params = [{transform_indices = @transform_0, window_bounds = array<i64: 16, 128>}, {transform_indices = @transform_1, window_bounds = array<i64: 1, 16, 128>}, {transform_indices = @transform_2, window_bounds = array<i64: 1, 16, 128>}, {transform_indices = @transform_3, window_bounds = array<i64: 1, 16, 128>}]} {
    %0 = arith.subi %arg2, %arg3 : i32
    %c0_i32 = arith.constant 0 : i32
    %1 = arith.cmpi eq, %arg3, %c0_i32 : i32
    %2 = arith.extui %1 : i1 to i32
    %c0_i32_0 = arith.constant 0 : i32
    %3 = arith.cmpi ne, %2, %c0_i32_0 : i32
    scf.if %3 {
      %c0 = arith.constant 0 : index
      %c0_4 = arith.constant 0 : index
      %c0_5 = arith.constant 0 : index
      %10 = vector.load %arg6[%c0, %c0_4, %c0_5] : memref<1x16x128xf32, #tpu.memory_space<vmem>>, vector<1x16x128xf32>
      %11 = vector.shape_cast %10 : vector<1x16x128xf32> to vector<16x128xf32>
      %c0_6 = arith.constant 0 : index
      %c0_7 = arith.constant 0 : index
      %12 = vector.load %arg8[%c0_6, %c0_7] : memref<16x128xf32, #tpu.memory_space<vmem>>, vector<16x128xf32>
      tpu.vector_store %arg8[%c0_6, %c0_7], %11 {strides = array<i32>} : memref<16x128xf32, #tpu.memory_space<vmem>>, vector<16x128xf32>,
    } else {
    }
    %c0_i32_1 = arith.constant 0 : i32
    %4 = arith.cmpi sge, %0, %c0_i32_1 : i32
    %5 = arith.extui %4 : i1 to i32
    %c0_i32_2 = arith.constant 0 : i32
    %6 = arith.cmpi ne, %5, %c0_i32_2 : i32
    scf.if %6 {
      %c0 = arith.constant 0 : index
      %c0_4 = arith.constant 0 : index
      %c0_5 = arith.constant 0 : index
      %10 = vector.load %arg6[%c0, %c0_4, %c0_5] : memref<1x16x128xf32, #tpu.memory_space<vmem>>, vector<1x16x128xf32>
      %11 = vector.shape_cast %10 : vector<1x16x128xf32> to vector<16x128xf32>
      %c0_6 = arith.constant 0 : index
      %c0_7 = arith.constant 0 : index
      %c0_8 = arith.constant 0 : index
      %12 = vector.load %arg5[%c0_6, %c0_7, %c0_8] : memref<1x16x128xf32, #tpu.memory_space<vmem>>, vector<1x16x128xf32>
      %13 = vector.shape_cast %12 : vector<1x16x128xf32> to vector<16x128xf32>
      %c0_i32_9 = arith.constant 0 : i32
      %14 = arith.cmpi sgt, %0, %c0_i32_9 : i32
      %cst = arith.constant 0.000000e+00 : f32
      %15 = vector.broadcast %cst : f32 to vector<16x128xf32>
      %16 = arith.select %14, %13, %15 : vector<16x128xf32>
      %c0_10 = arith.constant 0 : index
      %c0_11 = arith.constant 0 : index
      %17 = vector.load %arg9[%c0_10, %c0_11] : memref<32x128xf32, #tpu.memory_space<vmem>>, vector<16x128xf32>
      tpu.vector_store %arg9[%c0_10, %c0_11], %16 {strides = array<i32>} : memref<32x128xf32, #tpu.memory_space<vmem>>, vector<16x128xf32>,
      %c16 = arith.constant 16 : index
      %c0_12 = arith.constant 0 : index
      %18 = vector.load %arg9[%c16, %c0_12] : memref<32x128xf32, #tpu.memory_space<vmem>>, vector<16x128xf32>
      tpu.vector_store %arg9[%c16, %c0_12], %11 {strides = array<i32>} : memref<32x128xf32, #tpu.memory_space<vmem>>, vector<16x128xf32>,
      %c0_13 = arith.constant 0 : index
      %c0_14 = arith.constant 0 : index
      %19 = vector.load %arg8[%c0_13, %c0_14] : memref<16x128xf32, #tpu.memory_space<vmem>>, vector<16x128xf32>
      %c0_i32_15 = arith.constant 0 : i32
      %c2_i32 = arith.constant 2 : i32
      %20 = arith.addi %c0_i32_15, %c2_i32 : i32
      %c1_i32 = arith.constant 1 : i32
      %21 = scf.for %arg10 = %c0_i32_15 to %20 step %c1_i32 iter_args(%arg11 = %19) -> (vector<16x128xf32>)  : i32 {
        %c8_i32 = arith.constant 8 : i32
        %23 = arith.muli %arg10, %c8_i32 : i32
        %24 = tpu.assume_multiple %23, 8 : i32
        %c0_i32_19 = arith.constant 0 : i32
        %25 = arith.addi %24, %c0_i32_19 : i32
        %26 = arith.index_cast %25 : i32 to index
        %c0_20 = arith.constant 0 : index
        %27 = vector.load %arg4[%26, %c0_20] : memref<16x128xf32, #tpu.memory_space<vmem>>, vector<1x128xf32>
        %c16_i32 = arith.constant 16 : i32
        %28 = arith.subi %c16_i32, %25 : i32
        %29 = arith.index_cast %28 : i32 to index
        %c0_21 = arith.constant 0 : index
        %30 = vector.load %arg9[%29, %c0_21] : memref<32x128xf32, #tpu.memory_space<vmem>>, vector<16x128xf32>
        %31 = vector.broadcast %27 : vector<1x128xf32> to vector<16x128xf32>
        %32 = arith.mulf %31, %30 : vector<16x128xf32>
        %33 = arith.addf %arg11, %32 : vector<16x128xf32>
        %c1_i32_22 = arith.constant 1 : i32
        %34 = arith.addi %24, %c1_i32_22 : i32
        %35 = arith.index_cast %34 : i32 to index
        %c0_23 = arith.constant 0 : index
        %36 = vector.load %arg4[%35, %c0_23] : memref<16x128xf32, #tpu.memory_space<vmem>>, vector<1x128xf32>
        %c16_i32_24 = arith.constant 16 : i32
        %37 = arith.subi %c16_i32_24, %34 : i32
        %38 = arith.index_cast %37 : i32 to index
        %c0_25 = arith.constant 0 : index
        %39 = vector.load %arg9[%38, %c0_25] : memref<32x128xf32, #tpu.memory_space<vmem>>, vector<16x128xf32>
        %40 = vector.broadcast %36 : vector<1x128xf32> to vector<16x128xf32>
        %41 = arith.mulf %40, %39 : vector<16x128xf32>
        %42 = arith.addf %33, %41 : vector<16x128xf32>
        %c2_i32_26 = arith.constant 2 : i32
        %43 = arith.addi %24, %c2_i32_26 : i32
        %44 = arith.index_cast %43 : i32 to index
        %c0_27 = arith.constant 0 : index
        %45 = vector.load %arg4[%44, %c0_27] : memref<16x128xf32, #tpu.memory_space<vmem>>, vector<1x128xf32>
        %c16_i32_28 = arith.constant 16 : i32
        %46 = arith.subi %c16_i32_28, %43 : i32
        %47 = arith.index_cast %46 : i32 to index
        %c0_29 = arith.constant 0 : index
        %48 = vector.load %arg9[%47, %c0_29] : memref<32x128xf32, #tpu.memory_space<vmem>>, vector<16x128xf32>
        %49 = vector.broadcast %45 : vector<1x128xf32> to vector<16x128xf32>
        %50 = arith.mulf %49, %48 : vector<16x128xf32>
        %51 = arith.addf %42, %50 : vector<16x128xf32>
        %c3_i32_30 = arith.constant 3 : i32
        %52 = arith.addi %24, %c3_i32_30 : i32
        %53 = arith.index_cast %52 : i32 to index
        %c0_31 = arith.constant 0 : index
        %54 = vector.load %arg4[%53, %c0_31] : memref<16x128xf32, #tpu.memory_space<vmem>>, vector<1x128xf32>
        %c16_i32_32 = arith.constant 16 : i32
        %55 = arith.subi %c16_i32_32, %52 : i32
        %56 = arith.index_cast %55 : i32 to index
        %c0_33 = arith.constant 0 : index
        %57 = vector.load %arg9[%56, %c0_33] : memref<32x128xf32, #tpu.memory_space<vmem>>, vector<16x128xf32>
        %58 = vector.broadcast %54 : vector<1x128xf32> to vector<16x128xf32>
        %59 = arith.mulf %58, %57 : vector<16x128xf32>
        %60 = arith.addf %51, %59 : vector<16x128xf32>
        %c4_i32 = arith.constant 4 : i32
        %61 = arith.addi %24, %c4_i32 : i32
        %62 = arith.index_cast %61 : i32 to index
        %c0_34 = arith.constant 0 : index
        %63 = vector.load %arg4[%62, %c0_34] : memref<16x128xf32, #tpu.memory_space<vmem>>, vector<1x128xf32>
        %c16_i32_35 = arith.constant 16 : i32
        %64 = arith.subi %c16_i32_35, %61 : i32
        %65 = arith.index_cast %64 : i32 to index
        %c0_36 = arith.constant 0 : index
        %66 = vector.load %arg9[%65, %c0_36] : memref<32x128xf32, #tpu.memory_space<vmem>>, vector<16x128xf32>
        %67 = vector.broadcast %63 : vector<1x128xf32> to vector<16x128xf32>
        %68 = arith.mulf %67, %66 : vector<16x128xf32>
        %69 = arith.addf %60, %68 : vector<16x128xf32>
        %c5_i32 = arith.constant 5 : i32
        %70 = arith.addi %24, %c5_i32 : i32
        %71 = arith.index_cast %70 : i32 to index
        %c0_37 = arith.constant 0 : index
        %72 = vector.load %arg4[%71, %c0_37] : memref<16x128xf32, #tpu.memory_space<vmem>>, vector<1x128xf32>
        %c16_i32_38 = arith.constant 16 : i32
        %73 = arith.subi %c16_i32_38, %70 : i32
        %74 = arith.index_cast %73 : i32 to index
        %c0_39 = arith.constant 0 : index
        %75 = vector.load %arg9[%74, %c0_39] : memref<32x128xf32, #tpu.memory_space<vmem>>, vector<16x128xf32>
        %76 = vector.broadcast %72 : vector<1x128xf32> to vector<16x128xf32>
        %77 = arith.mulf %76, %75 : vector<16x128xf32>
        %78 = arith.addf %69, %77 : vector<16x128xf32>
        %c6_i32 = arith.constant 6 : i32
        %79 = arith.addi %24, %c6_i32 : i32
        %80 = arith.index_cast %79 : i32 to index
        %c0_40 = arith.constant 0 : index
        %81 = vector.load %arg4[%80, %c0_40] : memref<16x128xf32, #tpu.memory_space<vmem>>, vector<1x128xf32>
        %c16_i32_41 = arith.constant 16 : i32
        %82 = arith.subi %c16_i32_41, %79 : i32
        %83 = arith.index_cast %82 : i32 to index
        %c0_42 = arith.constant 0 : index
        %84 = vector.load %arg9[%83, %c0_42] : memref<32x128xf32, #tpu.memory_space<vmem>>, vector<16x128xf32>
        %85 = vector.broadcast %81 : vector<1x128xf32> to vector<16x128xf32>
        %86 = arith.mulf %85, %84 : vector<16x128xf32>
        %87 = arith.addf %78, %86 : vector<16x128xf32>
        %c7_i32 = arith.constant 7 : i32
        %88 = arith.addi %24, %c7_i32 : i32
        %89 = arith.index_cast %88 : i32 to index
        %c0_43 = arith.constant 0 : index
        %90 = vector.load %arg4[%89, %c0_43] : memref<16x128xf32, #tpu.memory_space<vmem>>, vector<1x128xf32>
        %c16_i32_44 = arith.constant 16 : i32
        %91 = arith.subi %c16_i32_44, %88 : i32
        %92 = arith.index_cast %91 : i32 to index
        %c0_45 = arith.constant 0 : index
        %93 = vector.load %arg9[%92, %c0_45] : memref<32x128xf32, #tpu.memory_space<vmem>>, vector<16x128xf32>
        %94 = vector.broadcast %90 : vector<1x128xf32> to vector<16x128xf32>
        %95 = arith.mulf %94, %93 : vector<16x128xf32>
        %96 = arith.addf %87, %95 : vector<16x128xf32>
        scf.yield %96 : vector<16x128xf32>
      }
      %c2_i32_16 = arith.constant 2 : i32
      %c0_17 = arith.constant 0 : index
      %c0_18 = arith.constant 0 : index
      %22 = vector.load %arg8[%c0_17, %c0_18] : memref<16x128xf32, #tpu.memory_space<vmem>>, vector<16x128xf32>
      tpu.vector_store %arg8[%c0_17, %c0_18], %21 {strides = array<i32>} : memref<16x128xf32, #tpu.memory_space<vmem>>, vector<16x128xf32>,
    } else {
    }
    %c3_i32 = arith.constant 3 : i32
    %7 = arith.cmpi eq, %arg3, %c3_i32 : i32
    %8 = arith.extui %7 : i1 to i32
    %c0_i32_3 = arith.constant 0 : i32
    %9 = arith.cmpi ne, %8, %c0_i32_3 : i32
    scf.if %9 {
      %c0 = arith.constant 0 : index
      %c0_4 = arith.constant 0 : index
      %10 = vector.load %arg8[%c0, %c0_4] : memref<16x128xf32, #tpu.memory_space<vmem>>, vector<16x128xf32>
      %c0_5 = arith.constant 0 : index
      %c0_6 = arith.constant 0 : index
      %c0_7 = arith.constant 0 : index
      %11 = vector.load %arg7[%c0_5, %c0_6, %c0_7] : memref<1x16x128xf32, #tpu.memory_space<vmem>>, vector<1x16x128xf32>
      %12 = vector.shape_cast %11 : vector<1x16x128xf32> to vector<16x128xf32>
      %13 = vector.shape_cast %10 : vector<16x128xf32> to vector<1x16x128xf32>
      tpu.vector_store %arg7[%c0_5, %c0_6, %c0_7], %13 {strides = array<i32>} : memref<1x16x128xf32, #tpu.memory_space<vmem>>, vector<1x16x128xf32>,
    } else {
    }
    return
  }
  func.func @transform_0(%arg0: i32, %arg1: i32, %arg2: i32, %arg3: i32) -> (i32, i32) {
    %c0_i32 = arith.constant 0 : i32
    return %arg3, %arg1 : i32, i32
  }
  func.func @transform_1(%arg0: i32, %arg1: i32, %arg2: i32, %arg3: i32) -> (i32, i32, i32) {
    %0 = arith.subi %arg2, %arg3 : i32
    %c1_i32 = arith.constant 1 : i32
    %1 = arith.subi %0, %c1_i32 : i32
    %c0_i32 = arith.constant 0 : i32
    %2 = arith.maxsi %1, %c0_i32 : i32
    %c0_i32_0 = arith.constant 0 : i32
    return %arg0, %2, %arg1 : i32, i32, i32
  }
  func.func @transform_2(%arg0: i32, %arg1: i32, %arg2: i32, %arg3: i32) -> (i32, i32, i32) {
    %0 = arith.subi %arg2, %arg3 : i32
    %c0_i32 = arith.constant 0 : i32
    %1 = arith.maxsi %0, %c0_i32 : i32
    %c0_i32_0 = arith.constant 0 : i32
    return %arg0, %1, %arg1 : i32, i32, i32
  }
  func.func @transform_3(%arg0: i32, %arg1: i32, %arg2: i32, %arg3: i32) -> (i32, i32, i32) {
    %c0_i32 = arith.constant 0 : i32
    return %arg0, %arg2, %arg1 : i32, i32, i32
  }
}

</mosaic_0001>

<llo_original>
// kernel: tpu_custom_call.1
$region0: #{tpu_custom_call.1}
  #allocation0 [shape = 'u32[]', space=smem, size = 0x4, offset = 0x4, fixed_abs, tag = 'smem constant byte address 0x4 - core index']
  #allocation1 [shape = 'u32[72,128]{1,0:T(1,128)}', space=vmem, size = 0x9000, scoped, tag = 'internal scratch']
  #allocation2 [shape = 'f32[16,128]{1,0:T(8,128)}', space=vmem, size = 0x2000, scoped, tag = 'scratch operand']
  #allocation3 [shape = 'f32[32,128]{1,0:T(8,128)}', space=vmem, size = 0x4000, scoped, tag = 'scratch operand']
  %s0 = inlined_call_operand.hbm [shape: f32[64,128], index: 0, kind: input, shape index: {}]
  %s1 = inlined_call_operand.hbm [shape: f32[2,64,128], index: 1, kind: input, shape index: {}]
  %s2 = inlined_call_operand.hbm [shape: f32[2,64,128], index: 2, kind: input, shape index: {}]
  %s3 = inlined_call_operand.hbm [shape: f32[2,64,128], index: 3, kind: output, shape index: {}]
  %s4 = sld [smem:[#allocation0]]
  $region76: #{tpu_custom_call.1} parent=0
    _
  %s6 = ssub.s32 1, %s4
  %s7 = scalar_select 0, %s6, %s4
  $region1: #{tpu_custom_call.1} parent=0
    #allocation4 [shape = 'u8[16384]{0}', space=vmem, size = 0x4000, scoped, tag = 'input window, operand 0']
    #allocation5 [shape = 's32[2]{0}', space=sflag, size = 0x8, scoped, tag = 'scoped memory for tpu_custom_call.1']
    #allocation6 [shape = 's32[2]{0}', space=sflag, size = 0x8, scoped, tag = 'scoped memory for tpu_custom_call.1']
    #allocation7 [shape = 'u8[16384]{0}', space=vmem, size = 0x4000, scoped, tag = 'input window, operand 1']
    #allocation8 [shape = 's32[2]{0}', space=sflag, size = 0x8, scoped, tag = 'scoped memory for tpu_custom_call.1']
    #allocation9 [shape = 'u8[16384]{0}', space=vmem, size = 0x4000, scoped, tag = 'input window, operand 2']
    #allocation10 [shape = 'u8[16384]{0}', space=vmem, size = 0x4000, scoped, tag = 'output window, operand 0']
    %8 = vsyncpa [#allocation5], 0
    %s9 = scalar_lea.sflag [#allocation5], 1
    %10 = vsyncpa %s9, 0
    %11 = vsyncpa [#allocation8], 0
    %s12 = scalar_lea.sflag [#allocation8], 1
    %13 = vsyncpa %s12, 0
    %14 = vsyncpa [#allocation6], 0
    %s15 = scalar_lea.sflag [#allocation6], 1
    %16 = vsyncpa %s15, 0
    loop: start=0, step=1, limit=34
    $region2: #{tpu_custom_call.1} parent=1 // loop_pre_header
      _
    $region3: #{tpu_custom_call.1} parent=1 // loop_header
      %s18 = sphi 0, %s22
      %p19 = scmp.ge.s32.totalorder %s18, 34
      %s25 = sphi 0, %s51
      %s26 = sphi 0, %s47
      %s27 = sphi 0, %s43
      %s28 = sphi 0, %s39
      %s29 = sphi 0, %s25
      %s30 = sphi 0, %s26
      %s31 = sphi 0, %s27
      %s32 = sphi 0, %s28
      %s33 = sphi 0, %s29
      %s34 = sphi 0, %s30
      %s35 = sphi 0, %s31
      %s36 = sphi 0, %s32
      %s56 = sphi 0, %s58
      %s59 = sphi 0, %s56
      %s60 = sphi 0, %s59
      %s76 = sphi 0, %s60
      %s94 = sphi 0, %s96
      %s97 = sphi 0, %s94
      %s98 = sphi 0, %s97
      %s114 = sphi 0, %s98
      %s130 = sphi 0, %s132
      %s133 = sphi 0, %s130
      %s134 = sphi 0, %s133
      %s150 = sphi 0, %s134
      %s160 = sphi 0, %s162
      %s163 = sphi 0, %s160
      %s164 = sphi 0, %s163
      %s180 = sphi 0, %s164
    $region4: #{tpu_custom_call.1} parent=1 // loop_header_branch
      %21 = sbr.rel (%p19) target = $region8
    $region5: #{tpu_custom_call.1} parent=1 // loop_body
      %s23 = ssub.s32 %s18, 1
      %s24 = ssub.s32 %s18, 2
      %s37 = sadd.s32 1, %s28
      %p38 = scmp.ge.s32.totalorder %s37, 4
      %s39 = scalar_select %p38, 0, %s37
      %s40 = sadd.s32 1, %s27
      %s41 = scalar_select %p38, %s40, %s27
      %p42 = scmp.ge.s32.totalorder %s41, 4
      %s43 = scalar_select %p42, 0, %s41
      %s44 = sadd.s32 1, %s26
      %s45 = scalar_select %p42, %s44, %s26
      %p46 = scmp.ge.s32.totalorder %s45, 1
      %s47 = scalar_select %p46, 0, %s45
      %s48 = sadd.s32 1, %s25
      %s49 = scalar_select %p46, %s48, %s25
      %p50 = scmp.ge.s32.totalorder %s49, 2
      %s51 = scalar_select %p50, 0, %s49
      %s52 = ssub.s32 %s28, %s39
      %s53 = ssub.s32 %s26, %s47
      %s54 = sor.u32 %s52, %s53
      %p55 = scmp.eq.s32.totalorder %s54, 0
      %s57 = sadd.s32 %s56, 1
      %s58 = scalar_select %p55, %s56, %s57
      %p61 = pneg %p55
      %p62 = scmp.eq.s32.totalorder %s18, 31
      %p63 = por %p61, %p62
      %p64 = scmp.ne.s32.totalorder %s56, %s59
      %p65 = scmp.eq.s32.totalorder %s18, 0
      %p66 = por %p64, %p65
      %p67 = scmp.ne.s32.totalorder %s56, %s59
      %p68 = scmp.eq.s32.totalorder %s23, 31
      %p69 = por %p67, %p68
      %p70 = scmp.ne.s32.totalorder %s59, %s60
      %p71 = scmp.eq.s32.totalorder %s23, 0
      %p72 = por %p70, %p71
      %p73 = scmp.ne.s32.totalorder %s59, %s60
      %p74 = scmp.eq.s32.totalorder %s24, 31
      %p75 = por %p73, %p74
      %p77 = scmp.ne.s32.totalorder %s60, %s76
      %p78 = scmp.eq.s32.totalorder %s24, 0
      %p79 = por %p77, %p78
      %s80 = ssub.s32 %s27, %s28
      %s81 = ssub.s32 %s80, 1
      %p82 = scmp.gt.s32.totalorder %s81, 0
      %s83 = scalar_select %p82, %s81, 0
      %s84 = ssub.s32 %s43, %s39
      %s85 = ssub.s32 %s84, 1
      %p86 = scmp.gt.s32.totalorder %s85, 0
      %s87 = scalar_select %p86, %s85, 0
      %s88 = ssub.s32 %s25, %s51
      %s89 = ssub.s32 %s83, %s87
      %s90 = sor.u32 %s88, %s89
      %s91 = ssub.s32 %s26, %s47
      %s92 = sor.u32 %s90, %s91
      %p93 = scmp.eq.s32.totalorder %s92, 0
      %s95 = sadd.s32 %s94, 1
      %s96 = scalar_select %p93, %s94, %s95
      %p99 = pneg %p93
      %p100 = scmp.eq.s32.totalorder %s18, 31
      %p101 = por %p99, %p100
      %p102 = scmp.ne.s32.totalorder %s94, %s97
      %p103 = scmp.eq.s32.totalorder %s18, 0
      %p104 = por %p102, %p103
      %p105 = scmp.ne.s32.totalorder %s94, %s97
      %p106 = scmp.eq.s32.totalorder %s23, 31
      %p107 = por %p105, %p106
      %p108 = scmp.ne.s32.totalorder %s97, %s98
      %p109 = scmp.eq.s32.totalorder %s23, 0
      %p110 = por %p108, %p109
      %p111 = scmp.ne.s32.totalorder %s97, %s98
      %p112 = scmp.eq.s32.totalorder %s24, 31
      %p113 = por %p111, %p112
      %p115 = scmp.ne.s32.totalorder %s98, %s114
      %p116 = scmp.eq.s32.totalorder %s24, 0
      %p117 = por %p115, %p116
      %s118 = ssub.s32 %s27, %s28
      %p119 = scmp.gt.s32.totalorder %s118, 0
      %s120 = scalar_select %p119, %s118, 0
      %s121 = ssub.s32 %s43, %s39
      %p122 = scmp.gt.s32.totalorder %s121, 0
      %s123 = scalar_select %p122, %s121, 0
      %s124 = ssub.s32 %s25, %s51
      %s125 = ssub.s32 %s120, %s123
      %s126 = sor.u32 %s124, %s125
      %s127 = ssub.s32 %s26, %s47
      %s128 = sor.u32 %s126, %s127
      %p129 = scmp.eq.s32.totalorder %s128, 0
      %s131 = sadd.s32 %s130, 1
      %s132 = scalar_select %p129, %s130, %s131
      %p135 = pneg %p129
      %p136 = scmp.eq.s32.totalorder %s18, 31
      %p137 = por %p135, %p136
      %p138 = scmp.ne.s32.totalorder %s130, %s133
      %p139 = scmp.eq.s32.totalorder %s18, 0
      %p140 = por %p138, %p139
      %p141 = scmp.ne.s32.totalorder %s130, %s133
      %p142 = scmp.eq.s32.totalorder %s23, 31
      %p143 = por %p141, %p142
      %p144 = scmp.ne.s32.totalorder %s133, %s134
      %p145 = scmp.eq.s32.totalorder %s23, 0
      %p146 = por %p144, %p145
      %p147 = scmp.ne.s32.totalorder %s133, %s134
      %p148 = scmp.eq.s32.totalorder %s24, 31
      %p149 = por %p147, %p148
      %p151 = scmp.ne.s32.totalorder %s134, %s150
      %p152 = scmp.eq.s32.totalorder %s24, 0
      %p153 = por %p151, %p152
      %s154 = ssub.s32 %s25, %s51
      %s155 = ssub.s32 %s27, %s43
      %s156 = sor.u32 %s154, %s155
      %s157 = ssub.s32 %s26, %s47
      %s158 = sor.u32 %s156, %s157
      %p159 = scmp.eq.s32.totalorder %s158, 0
      %s161 = sadd.s32 %s160, 1
      %s162 = scalar_select %p159, %s160, %s161
      %p165 = pneg %p159
      %p166 = scmp.eq.s32.totalorder %s18, 31
      %p167 = por %p165, %p166
      %p168 = scmp.ne.s32.totalorder %s160, %s163
      %p169 = scmp.eq.s32.totalorder %s18, 0
      %p170 = por %p168, %p169
      %p171 = scmp.ne.s32.totalorder %s160, %s163
      %p172 = scmp.eq.s32.totalorder %s23, 31
      %p173 = por %p171, %p172
      %p174 = scmp.ne.s32.totalorder %s163, %s164
      %p175 = scmp.eq.s32.totalorder %s23, 0
      %p176 = por %p174, %p175
      %p177 = scmp.ne.s32.totalorder %s163, %s164
      %p178 = scmp.eq.s32.totalorder %s24, 31
      %p179 = por %p177, %p178
      %p181 = scmp.ne.s32.totalorder %s164, %s180
      %p182 = scmp.eq.s32.totalorder %s24, 0
      %p183 = por %p181, %p182
      %p184 = scmp.le.s32.totalorder 1, %s18
      %p185 = scmp.lt.s32.totalorder %s18, 33
      %p186 = pnand %p184, %p185
      %p187 = pneg %p186
      // Predicated region
      $region9: #{tpu_custom_call.1} parent=5 // pred_check
        _
      $region10: #{tpu_custom_call.1} parent=5 // pred_check_branch
        %189 = sbr.rel (%p186) target = $region12
      $region11: #{tpu_custom_call.1} parent=5 // pred_region
        %s190 = ssub.s32 %s18, 1
      $region12: #{tpu_custom_call.1} parent=5 // pred_fallthru
        _
      %p191 = scmp.lt.s32.totalorder %s18, 32
      // Predicated region
      $region13: #{tpu_custom_call.1} parent=5 // pred_check
        %p192 = pneg %p191
      $region14: #{tpu_custom_call.1} parent=5 // pred_check_branch
        %194 = sbr.rel (%p192) target = $region16
      $region15: #{tpu_custom_call.1} parent=5 // pred_region
        // Predicated region
        $region17: #{tpu_custom_call.1} parent=15 // pred_check
          %p195 = pneg %p66
        $region18: #{tpu_custom_call.1} parent=15 // pred_check_branch
          %197 = sbr.rel (%p195) target = $region20
        $region19: #{tpu_custom_call.1} parent=15 // pred_region
          %s198 = sand.u32 %s56, 1
          %s199 = scalar_lea.sflag [#allocation5], %s198
          %s200 = sand.u32 %s56, 1
          %s201 = smul.addr %s200, 16
          %s202 = scalar_lea.vmem [#allocation4], %s201
          %s203 = smul.u32 2, %s28
          %205 = vsyncadd %s199, 0
          %s206 = sadd.s32 %s26, %s203
          %s207 = smul.addr %s206, 8
          %s208 = scalar_lea.hbm %s0, %s207
          %s209 = sshll.u32 %s208, 4
          %s210 = int_to_ptr.hbm [resolvable:$true] %s209
          %s211 = sshll.u32 %s202, 4
          %s212 = int_to_ptr.vmem [resolvable:$true] %s211
          %217 = dma.hbm_to_vmem [thread:$0]  %s210, 256, %s212, %s199, 128, 128, 8
        $region20: #{tpu_custom_call.1} parent=15 // pred_fallthru
          _
        // Predicated region
        $region21: #{tpu_custom_call.1} parent=15 // pred_check
          %p218 = pneg %p104
        $region22: #{tpu_custom_call.1} parent=15 // pred_check_branch
          %220 = sbr.rel (%p218) target = $region24
        $region23: #{tpu_custom_call.1} parent=15 // pred_region
          %s221 = sand.u32 %s18, 1
          %s222 = scalar_lea.sflag [#allocation8], %s221
          %s223 = sand.u32 %s94, 1
          %s224 = smul.addr %s223, 16
          %s225 = scalar_lea.vmem [#allocation7], %s224
          %s226 = ssub.s32 %s27, %s28
          %s227 = ssub.s32 %s226, 1
          %p228 = scmp.gt.s32.totalorder %s227, 0
          %s229 = scalar_select %p228, %s227, 0
          %s230 = smul.u32 2, %s229
          %232 = vsyncadd %s222, 0
          %s233 = sadd.s32 %s26, %s230
          %s234 = smul.addr %s25, 8
          %s235 = sadd.s32 %s233, %s234
          %s236 = smul.addr %s235, 8
          %s237 = scalar_lea.hbm %s1, %s236
          %s238 = sshll.u32 %s237, 4
          %s239 = int_to_ptr.hbm [resolvable:$true] %s238
          %s240 = sshll.u32 %s225, 4
          %s241 = int_to_ptr.vmem [resolvable:$true] %s240
          %246 = dma.hbm_to_vmem [thread:$0]  %s239, 256, %s241, %s222, 128, 128, 8
        $region24: #{tpu_custom_call.1} parent=15 // pred_fallthru
          _
        // Predicated region
        $region25: #{tpu_custom_call.1} parent=15 // pred_check
          %p247 = pneg %p140
        $region26: #{tpu_custom_call.1} parent=15 // pred_check_branch
          %249 = sbr.rel (%p247) target = $region28
        $region27: #{tpu_custom_call.1} parent=15 // pred_region
          %s250 = sand.u32 %s18, 1
          %s251 = scalar_lea.sflag [#allocation8], %s250
          %s252 = sand.u32 %s130, 1
          %s253 = smul.addr %s252, 16
          %s254 = scalar_lea.vmem [#allocation9], %s253
          %s255 = ssub.s32 %s27, %s28
          %p256 = scmp.gt.s32.totalorder %s255, 0
          %s257 = scalar_select %p256, %s255, 0
          %s258 = smul.u32 2, %s257
          %260 = vsyncadd %s251, 0
          %s261 = sadd.s32 %s26, %s258
          %s262 = smul.addr %s25, 8
          %s263 = sadd.s32 %s261, %s262
          %s264 = smul.addr %s263, 8
          %s265 = scalar_lea.hbm %s2, %s264
          %s266 = sshll.u32 %s265, 4
          %s267 = int_to_ptr.hbm [resolvable:$true] %s266
          %s268 = sshll.u32 %s254, 4
          %s269 = int_to_ptr.vmem [resolvable:$true] %s268
          %274 = dma.hbm_to_vmem [thread:$0]  %s267, 256, %s269, %s251, 128, 128, 8
        $region28: #{tpu_custom_call.1} parent=15 // pred_fallthru
          _
      $region16: #{tpu_custom_call.1} parent=5 // pred_fallthru
        _
      %p275 = scmp.le.s32.totalorder 1, %s18
      %p276 = scmp.lt.s32.totalorder %s18, 33
      %p277 = pnand %p275, %p276
      %p278 = pneg %p277
      // Predicated region
      $region29: #{tpu_custom_call.1} parent=5 // pred_check
        _
      $region30: #{tpu_custom_call.1} parent=5 // pred_check_branch
        %280 = sbr.rel (%p277) target = $region32
      $region31: #{tpu_custom_call.1} parent=5 // pred_region
        %s281 = ssub.s32 %s18, 1
        %s282 = sand.u32 %s59, 1
        %s283 = scalar_lea.sflag [#allocation5], %s282
        %s284 = sand.u32 %s59, 1
        %s285 = smul.addr %s284, 16
        %s286 = scalar_lea.vmem [#allocation4], %s285
        // Predicated region
        $region33: #{tpu_custom_call.1} parent=31 // pred_check
          %p287 = pneg %p72
        $region34: #{tpu_custom_call.1} parent=31 // pred_check_branch
          %289 = sbr.rel (%p287) target = $region36
        $region35: #{tpu_custom_call.1} parent=31 // pred_region
          %291 = dma.done %s283, 256
        $region36: #{tpu_custom_call.1} parent=31 // pred_fallthru
          _
        %s292 = sand.u32 %s23, 1
        %s293 = scalar_lea.sflag [#allocation8], %s292
        %s294 = sand.u32 %s97, 1
        %s295 = smul.addr %s294, 16
        %s296 = scalar_lea.vmem [#allocation7], %s295
        // Predicated region
        $region37: #{tpu_custom_call.1} parent=31 // pred_check
          %p297 = pneg %p110
        $region38: #{tpu_custom_call.1} parent=31 // pred_check_branch
          %299 = sbr.rel (%p297) target = $region40
        $region39: #{tpu_custom_call.1} parent=31 // pred_region
          %301 = dma.done %s293, 256
        $region40: #{tpu_custom_call.1} parent=31 // pred_fallthru
          _
        %s302 = sand.u32 %s23, 1
        %s303 = scalar_lea.sflag [#allocation8], %s302
        %s304 = sand.u32 %s133, 1
        %s305 = smul.addr %s304, 16
        %s306 = scalar_lea.vmem [#allocation9], %s305
        // Predicated region
        $region41: #{tpu_custom_call.1} parent=31 // pred_check
          %p307 = pneg %p146
        $region42: #{tpu_custom_call.1} parent=31 // pred_check_branch
          %309 = sbr.rel (%p307) target = $region44
        $region43: #{tpu_custom_call.1} parent=31 // pred_region
          %311 = dma.done %s303, 256
        $region44: #{tpu_custom_call.1} parent=31 // pred_fallthru
          _
        %s312 = sand.u32 %s59, 1
        %s313 = scalar_lea.sflag [#allocation5], %s312
        %s314 = sand.u32 %s59, 1
        %s315 = smul.addr %s314, 16
        %s316 = scalar_lea.vmem [#allocation4], %s315
        %p317 = pneg %p72
        %p318 = pneg %p69
        %s319 = sand.u32 %s23, 1
        %s320 = scalar_lea.sflag [#allocation8], %s319
        %s321 = sand.u32 %s97, 1
        %s322 = smul.addr %s321, 16
        %s323 = scalar_lea.vmem [#allocation7], %s322
        %p324 = pneg %p110
        %p325 = pneg %p107
        %s326 = sand.u32 %s23, 1
        %s327 = scalar_lea.sflag [#allocation8], %s326
        %s328 = sand.u32 %s133, 1
        %s329 = smul.addr %s328, 16
        %s330 = scalar_lea.vmem [#allocation9], %s329
        %p331 = pneg %p146
        %p332 = pneg %p143
        %p333 = pneg %p176
        %p334 = pneg %p173
        %s335 = sand.u32 %s163, 1
        %s336 = scalar_lea.sflag [#allocation6], %s335
        %s337 = sand.u32 %s163, 1
        %s338 = smul.addr %s337, 16
        %s339 = scalar_lea.vmem [#allocation10], %s338
        %s340 = smul.u32 2, %s32
        %s341 = ssub.s32 %s31, %s32
        %s342 = ssub.s32 %s341, 1
        %p343 = scmp.gt.s32.totalorder %s342, 0
        %s344 = scalar_select %p343, %s342, 0
        %s345 = smul.u32 2, %s344
        %s346 = ssub.s32 %s31, %s32
        %p347 = scmp.gt.s32.totalorder %s346, 0
        %s348 = scalar_select %p347, %s346, 0
        %s349 = smul.u32 2, %s348
        %s350 = smul.u32 2, %s31
        %s351 = ssub.s32 %s31, %s32
        %p352 = scmp.eq.s32.totalorder %s32, 0
        // Predicated region
        $region45: #{tpu_custom_call.1} parent=31 // pred_check
          %p353 = pneg %p352
        $region46: #{tpu_custom_call.1} parent=31 // pred_check_branch
          %355 = sbr.rel (%p353) target = $region48
        $region47: #{tpu_custom_call.1} parent=31 // pred_region
          %v356 = vld [vmem:[%s306] sm:$0xff]
          %v357 = vld [vmem:[%s306 + $0x8] sm:$0xff]
          %358 = vst [vmem:[#allocation2] sm:$0xff] %v356
          %359 = vst [vmem:[#allocation2 + $0x8] sm:$0xff] %v357
        $region48: #{tpu_custom_call.1} parent=31 // pred_fallthru
          _
        %p360 = scmp.ge.s32.totalorder %s351, 0
        // Predicated region
        $region49: #{tpu_custom_call.1} parent=31 // pred_check
          %p361 = pneg %p360
        $region50: #{tpu_custom_call.1} parent=31 // pred_check_branch
          %363 = sbr.rel (%p361) target = $region52
        $region51: #{tpu_custom_call.1} parent=31 // pred_region
          %v364 = vld [vmem:[%s306] sm:$0xff]
          %v365 = vld [vmem:[%s306 + $0x8] sm:$0xff]
          %v366 = vld [vmem:[%s296] sm:$0xff]
          %v367 = vld [vmem:[%s296 + $0x8] sm:$0xff]
          %p368 = scmp.gt.s32.totalorder %s351, 0
          %s369 = scalar_select %p368, 1, 0
          %v370 = vstv %s369
          %vm371 = vcmp.eq.s32.totalorder %v370, 1
          %v372 = vsel %vm371, %v366, 0.0
          %v373 = vsel %vm371, %v367, 0.0
          %374 = vst [vmem:[#allocation3] sm:$0xff] %v372
          %375 = vst [vmem:[#allocation3 + $0x8] sm:$0xff] %v373
          %376 = vst [vmem:[#allocation3 + $0x10] sm:$0xff] %v364
          %377 = vst [vmem:[#allocation3 + $0x18] sm:$0xff] %v365
          %v378 = vld [vmem:[#allocation2] sm:$0xff]
          %v379 = vld [vmem:[#allocation2 + $0x8] sm:$0xff]
          loop: start=0, step=1, limit=2
          $region53: #{tpu_custom_call.1} parent=51 // loop_pre_header
            _
          $region54: #{tpu_custom_call.1} parent=51 // loop_header
            %s381 = sphi 0, %s385
            %p382 = scmp.ge.s32.totalorder %s381, 2
            %v386 = vphi %v378, %v482
            %v387 = vphi %v379, %v483
          $region55: #{tpu_custom_call.1} parent=51 // loop_header_branch
            %384 = sbr.rel (%p382) target = $region59
          $region56: #{tpu_custom_call.1} parent=51 // loop_body
            %s388 = smul.u32 %s381, 8
            %s389 = scalar_lea.vmem %s286, %s388 [#allocation4]
            %v390 = vld [vmem:[%s389] sm:$0x1]
            %s391 = ssub.s32 16, %s388
            %s392 = scalar_lea.vmem [#allocation3], %s391
            %v393 = vld [vmem:[%s392] sm:$0xff]
            %v394 = vld [vmem:[%s392 + $0x8] sm:$0xff]
            %v395 = vperm.slane %v390, 0
            %v396 = vmul.f32 %v395, %v393
            %v397 = vmul.f32 %v395, %v394
            %v398 = vadd.f32 %v386, %v396
            %v399 = vadd.f32 %v387, %v397
            %s400 = sadd.s32 %s388, 1
            %s401 = scalar_lea.vmem %s286, %s400 [#allocation4]
            %v402 = vld [vmem:[%s401] sm:$0x1]
            %s403 = ssub.s32 15, %s388
            %s404 = scalar_lea.vmem [#allocation3], %s403
            %v405 = vld [vmem:[%s404] sm:$0xff]
            %v406 = vld [vmem:[%s404 + $0x8] sm:$0xff]
            %v407 = vperm.slane %v402, 0
            %v408 = vmul.f32 %v407, %v405
            %v409 = vmul.f32 %v407, %v406
            %v410 = vadd.f32 %v398, %v408
            %v411 = vadd.f32 %v399, %v409
            %s412 = sadd.s32 %s388, 2
            %s413 = scalar_lea.vmem %s286, %s412 [#allocation4]
            %v414 = vld [vmem:[%s413] sm:$0x1]
            %s415 = ssub.s32 14, %s388
            %s416 = scalar_lea.vmem [#allocation3], %s415
            %v417 = vld [vmem:[%s416] sm:$0xff]
            %v418 = vld [vmem:[%s416 + $0x8] sm:$0xff]
            %v419 = vperm.slane %v414, 0
            %v420 = vmul.f32 %v419, %v417
            %v421 = vmul.f32 %v419, %v418
            %v422 = vadd.f32 %v410, %v420
            %v423 = vadd.f32 %v411, %v421
            %s424 = sadd.s32 %s388, 3
            %s425 = scalar_lea.vmem %s286, %s424 [#allocation4]
            %v426 = vld [vmem:[%s425] sm:$0x1]
            %s427 = ssub.s32 13, %s388
            %s428 = scalar_lea.vmem [#allocation3], %s427
            %v429 = vld [vmem:[%s428] sm:$0xff]
            %v430 = vld [vmem:[%s428 + $0x8] sm:$0xff]
            %v431 = vperm.slane %v426, 0
            %v432 = vmul.f32 %v431, %v429
            %v433 = vmul.f32 %v431, %v430
            %v434 = vadd.f32 %v422, %v432
            %v435 = vadd.f32 %v423, %v433
            %s436 = sadd.s32 %s388, 4
            %s437 = scalar_lea.vmem %s286, %s436 [#allocation4]
            %v438 = vld [vmem:[%s437] sm:$0x1]
            %s439 = ssub.s32 12, %s388
            %s440 = scalar_lea.vmem [#allocation3], %s439
            %v441 = vld [vmem:[%s440] sm:$0xff]
            %v442 = vld [vmem:[%s440 + $0x8] sm:$0xff]
            %v443 = vperm.slane %v438, 0
            %v444 = vmul.f32 %v443, %v441
            %v445 = vmul.f32 %v443, %v442
            %v446 = vadd.f32 %v434, %v444
            %v447 = vadd.f32 %v435, %v445
            %s448 = sadd.s32 %s388, 5
            %s449 = scalar_lea.vmem %s286, %s448 [#allocation4]
            %v450 = vld [vmem:[%s449] sm:$0x1]
            %s451 = ssub.s32 11, %s388
            %s452 = scalar_lea.vmem [#allocation3], %s451
            %v453 = vld [vmem:[%s452] sm:$0xff]
            %v454 = vld [vmem:[%s452 + $0x8] sm:$0xff]
            %v455 = vperm.slane %v450, 0
            %v456 = vmul.f32 %v455, %v453
            %v457 = vmul.f32 %v455, %v454
            %v458 = vadd.f32 %v446, %v456
            %v459 = vadd.f32 %v447, %v457
            %s460 = sadd.s32 %s388, 6
            %s461 = scalar_lea.vmem %s286, %s460 [#allocation4]
            %v462 = vld [vmem:[%s461] sm:$0x1]
            %s463 = ssub.s32 10, %s388
            %s464 = scalar_lea.vmem [#allocation3], %s463
            %v465 = vld [vmem:[%s464] sm:$0xff]
            %v466 = vld [vmem:[%s464 + $0x8] sm:$0xff]
            %v467 = vperm.slane %v462, 0
            %v468 = vmul.f32 %v467, %v465
            %v469 = vmul.f32 %v467, %v466
            %v470 = vadd.f32 %v458, %v468
            %v471 = vadd.f32 %v459, %v469
            %s472 = sadd.s32 %s388, 7
            %s473 = scalar_lea.vmem %s286, %s472 [#allocation4]
            %v474 = vld [vmem:[%s473] sm:$0x1]
            %s475 = ssub.s32 9, %s388
            %s476 = scalar_lea.vmem [#allocation3], %s475
            %v477 = vld [vmem:[%s476] sm:$0xff]
            %v478 = vld [vmem:[%s476 + $0x8] sm:$0xff]
            %v479 = vperm.slane %v474, 0
            %v480 = vmul.f32 %v479, %v477
            %v481 = vmul.f32 %v479, %v478
            %v482 = vadd.f32 %v470, %v480
            %v483 = vadd.f32 %v471, %v481
          $region57: #{tpu_custom_call.1} parent=51 // loop_footer
            %s385 = sadd.s32 1, %s381
          $region58: #{tpu_custom_call.1} parent=51 // loop_footer_branch
            %380 = sbr.rel target = $region54
          $region59: #{tpu_custom_call.1} parent=51 // loop_exit
            _
          %484 = vst [vmem:[#allocation2] sm:$0xff] %v386
          %485 = vst [vmem:[#allocation2 + $0x8] sm:$0xff] %v387
        $region52: #{tpu_custom_call.1} parent=31 // pred_fallthru
          _
        %p486 = scmp.eq.s32.totalorder %s32, 3
        // Predicated region
        $region60: #{tpu_custom_call.1} parent=31 // pred_check
          %p487 = pneg %p486
        $region61: #{tpu_custom_call.1} parent=31 // pred_check_branch
          %489 = sbr.rel (%p487) target = $region63
        $region62: #{tpu_custom_call.1} parent=31 // pred_region
          %v490 = vld [vmem:[#allocation2] sm:$0xff]
          %v491 = vld [vmem:[#allocation2 + $0x8] sm:$0xff]
          %492 = vst [vmem:[%s339] sm:$0xff] %v490
          %493 = vst [vmem:[%s339 + $0x8] sm:$0xff] %v491
        $region63: #{tpu_custom_call.1} parent=31 // pred_fallthru
          _
        %s494 = sand.u32 %s163, 1
        %s495 = scalar_lea.sflag [#allocation6], %s494
        %s496 = sand.u32 %s163, 1
        %s497 = smul.addr %s496, 16
        %s498 = scalar_lea.vmem [#allocation10], %s497
        // Predicated region
        $region64: #{tpu_custom_call.1} parent=31 // pred_check
          %p499 = pneg %p173
        $region65: #{tpu_custom_call.1} parent=31 // pred_check_branch
          %501 = sbr.rel (%p499) target = $region67
        $region66: #{tpu_custom_call.1} parent=31 // pred_region
          %s502 = smul.u32 2, %s31
          %504 = vsyncadd %s495, 0
          %s505 = sadd.s32 %s30, %s502
          %s506 = smul.addr %s29, 8
          %s507 = sadd.s32 %s505, %s506
          %s508 = smul.addr %s507, 8
          %s509 = scalar_lea.hbm %s3, %s508
          %s510 = sshll.u32 %s498, 4
          %s511 = int_to_ptr.vmem [resolvable:$true] %s510
          %s512 = sshll.u32 %s509, 4
          %s513 = int_to_ptr.hbm [resolvable:$true] %s512
          %518 = dma.vmem_to_hbm [thread:$0]  %s511, 256, %s513, %s495, 128, 128, 8
        $region67: #{tpu_custom_call.1} parent=31 // pred_fallthru
          _
      $region32: #{tpu_custom_call.1} parent=5 // pred_fallthru
        _
      %p519 = scmp.le.s32.totalorder 2, %s18
      // Predicated region
      $region68: #{tpu_custom_call.1} parent=5 // pred_check
        %p520 = pneg %p519
      $region69: #{tpu_custom_call.1} parent=5 // pred_check_branch
        %522 = sbr.rel (%p520) target = $region71
      $region70: #{tpu_custom_call.1} parent=5 // pred_region
        %s523 = ssub.s32 %s18, 2
        // Predicated region
        $region72: #{tpu_custom_call.1} parent=70 // pred_check
          %p524 = pneg %p179
        $region73: #{tpu_custom_call.1} parent=70 // pred_check_branch
          %526 = sbr.rel (%p524) target = $region75
        $region74: #{tpu_custom_call.1} parent=70 // pred_region
          %s527 = sand.u32 %s164, 1
          %s528 = scalar_lea.sflag [#allocation6], %s527
          %s529 = sand.u32 %s164, 1
          %s530 = smul.addr %s529, 16
          %s531 = scalar_lea.vmem [#allocation10], %s530
          %533 = dma.done %s528, 256
        $region75: #{tpu_custom_call.1} parent=70 // pred_fallthru
          _
      $region71: #{tpu_custom_call.1} parent=5 // pred_fallthru
        _
    $region6: #{tpu_custom_call.1} parent=1 // loop_footer
      %s22 = sadd.s32 1, %s18
    $region7: #{tpu_custom_call.1} parent=1 // loop_footer_branch
      %17 = sbr.rel target = $region3
    $region8: #{tpu_custom_call.1} parent=1 // loop_exit
      _
    %534 = vsyncpa [#allocation5], 1
    %s535 = scalar_lea.sflag [#allocation5], 1
    %536 = vsyncpa %s535, 1
    %537 = vsyncpa [#allocation8], 1
    %s538 = scalar_lea.sflag [#allocation8], 1
    %539 = vsyncpa %s538, 1
    %540 = vsyncpa [#allocation6], 1
    %s541 = scalar_lea.sflag [#allocation6], 1
    %542 = vsyncpa %s541, 1

</llo_original>
